<compile_context>
chip_gen: v5e
topology: v5e:2x2
jax: 0.10.0
libtpu: 0.0.40
codegen_flags: <defaults>
</compile_context>

<pallas_src>
import functools

import jax
import jax.numpy as jnp
from jax import lax
from jax.experimental import pallas as pl
from jax.experimental.pallas import tpu as pltpu


def _round_up(x, m):
    return (x + m - 1) // m * m


# ----------------------------- Pallas kernel ---------------------------------
def rnn_block_kernel(ids_ref,     # [T_BLK, B_BLK, 1]     int32  time-major token ids
                     wemb_ref,    # [V_pad, H_pad]        bf16   emb_table @ W_ih^T (fused)
                     whh_ref,     # [H_pad, H_pad]        bf16   W_hh^T (zero-padded)
                     brnn_ref,    # [1, H_pad]            f32    b_ih + b_hh
                     wfc_ref,     # [H_pad, C_OUT=8]      bf16   W_fc^T (8 output lanes)
                     bfc_ref,     # [1, C_OUT]            f32    b_fc
                     out_ref,     # [T_BLK, B_BLK, C_OUT] f32    logits in lanes 0..1
                     h_ref,       # [B_BLK, H_pad]        f32    hidden-state carry
                     buf_ref):    # [T_BLK, B_BLK, H_pad] f32    xproj / hidden stash
    t_blk = pl.program_id(1)
    T_BLK, B_BLK, _ = ids_ref.shape
    V_pad, H_pad = wemb_ref.shape
    C_OUT = wfc_ref.shape[1]
    TB = T_BLK * B_BLK
    cdt = wemb_ref.dtype                      # compute dtype for MXU operands

    # New batch block -> reset the hidden-state carry.
    @pl.when(t_blk == 0)
    def _():
        h_ref[...] = jnp.zeros_like(h_ref)

    # (1) Fused embedding gather + input projection for the whole time block:
    #     one_hot(ids) @ (emb_table @ W_ih^T), ONE bf16 MXU matmul, combined RNN
    #     bias folded in.  padding_idx=0 row of the fused matrix is zero.
    col = lax.broadcasted_iota(jnp.int32, (T_BLK, B_BLK, V_pad), 2)
    one_hot = (col == ids_ref[...]).astype(cdt).reshape(TB, V_pad)
    buf_ref[...] = (
        jnp.dot(one_hot, wemb_ref[...], preferred_element_type=jnp.float32)
        + brnn_ref[...]
    ).reshape(T_BLK, B_BLK, H_pad)

    w_hh = whh_ref[...]

    # (2) Serial recurrence: only h @ W_hh + tanh stays on the critical path.
    #     bf16 matmul operands, f32 accumulation / carry / tanh.
    def step(i, h):
        h_new = jnp.tanh(
            buf_ref[i]
            + jnp.dot(h.astype(cdt), w_hh, preferred_element_type=jnp.float32))
        buf_ref[i] = h_new
        return h_new

    h_ref[...] = lax.fori_loop(0, T_BLK, step, h_ref[...], unroll=8)

    # (3) Small FC epilogue: 8-lane output (logit0, logit1, zero pad).
    h_all = buf_ref[...].reshape(TB, H_pad).astype(cdt)
    logits = (jnp.dot(h_all, wfc_ref[...], preferred_element_type=jnp.float32)
              + bfc_ref[...])                                   # [TB, C_OUT] f32
    out_ref[...] = logits.reshape(T_BLK, B_BLK, C_OUT)


# ------------------------------ wrapper / model -------------------------------
class RNNCutModelPallas:
    LANE = 128
    SUBLANE = 8
    C_OUT = 8            # 2 real logit lanes, padded to 8 (was 128)

    def __init__(self, vocab_size, vector_num, hidden_size, max_length, key,
                 compute_dtype=jnp.bfloat16):
        self.vocab_size = vocab_size
        self.max_length = max_length
        D, H = vector_num, hidden_size
        self.D, self.H = D, H
        self.H_pad = _round_up(H, self.LANE)
        self.V_pad = _round_up(vocab_size, self.LANE)

        k = jax.random.split(key, 7)
        s = 1.0 / jnp.sqrt(jnp.float32(H))

        # Parameters match the PyTorch init distributions (Embedding ~ N(0,1) with
        # padding_idx=0 zeroed; RNN / Linear ~ U(-1/sqrt(H), 1/sqrt(H))).
        emb = jax.random.normal(k[0], (vocab_size, D), jnp.float32).at[0].set(0.0)
        w_ih = jax.random.uniform(k[1], (D, H), jnp.float32, -s, s)   # W_ih^T
        w_hh = jax.random.uniform(k[2], (H, H), jnp.float32, -s, s)   # W_hh^T
        b_ih = jax.random.uniform(k[3], (H,), jnp.float32, -s, s)
        b_hh = jax.random.uniform(k[4], (H,), jnp.float32, -s, s)
        sf = 1.0 / jnp.sqrt(jnp.float32(H))
        w_fc = jax.random.uniform(k[5], (H, 2), jnp.float32, -sf, sf)  # W_fc^T
        b_fc = jax.random.uniform(k[6], (2,), jnp.float32, -sf, sf)

        # Fused embedding + input projection (f32 product, stored in compute dtype).
        fused = emb @ w_ih                                             # [vocab, H]
        self.w_emb_ih = (jnp.zeros((self.V_pad, self.H_pad), jnp.float32)
                         .at[:vocab_size, :H].set(fused)).astype(compute_dtype)
        self.w_hh_t = (jnp.zeros((self.H_pad, self.H_pad), jnp.float32)
                       .at[:H, :H].set(w_hh)).astype(compute_dtype)
        self.b_rnn = (jnp.zeros((1, self.H_pad), jnp.float32)
                      .at[0, :H].set(b_ih + b_hh))
        self.w_fc_t = (jnp.zeros((self.H_pad, self.C_OUT), jnp.float32)
                       .at[:H, :2].set(w_fc)).astype(compute_dtype)
        self.b_fc = (jnp.zeros((1, self.C_OUT), jnp.float32)
                     .at[0, :2].set(b_fc))
        # Pass compute_dtype=jnp.float32 for a bit-closer-to-PyTorch parity path.

    @functools.partial(jax.jit, static_argnums=0)
    def _logits_and_preds(self, x):
        B, T = x.shape

        # Batch blocking: aim for >=2 blocks on the 'parallel' axis so both v7x
        # TensorCores get work when the batch is large enough.
        B_pad = _round_up(B, self.SUBLANE)
        if B_pad >= 2 * self.LANE:
            B_BLK = self.LANE
            B_pad = _round_up(B_pad, B_BLK)
        elif B_pad >= 32 and B_pad % 16 == 0:
            B_BLK = B_pad // 2
        else:
            B_BLK = B_pad

        # Time blocking: large enough to amortize per-grid-step overhead.
        T_BLK = min(32, _round_up(T, self.SUBLANE))
        T_pad = _round_up(T, T_BLK)
        nB, nT = B_pad // B_BLK, T_pad // T_BLK

        # Only int32 ids cross HBM (padding token 0 -> zero fused-weight row).
        # Time-major so the kernel's token ordering matches its buf layout.
        ids = jnp.zeros((B_pad, T_pad), jnp.int32).at[:B, :T].set(x)
        ids_tm = ids.T.reshape(T_pad, B_pad, 1)

        out = pl.pallas_call(
            rnn_block_kernel,
            out_shape=jax.ShapeDtypeStruct((T_pad, B_pad, self.C_OUT), jnp.float32),
            # Time axis LAST and 'arbitrary' -> the h carry (reset at t_blk==0) is
            # valid per batch block.  Do not reorder these grid axes.
            grid=(nB, nT),
            in_specs=[
                pl.BlockSpec((T_BLK, B_BLK, 1), lambda b, t: (t, b, 0)),
                pl.BlockSpec((self.V_pad, self.H_pad), lambda b, t: (0, 0)),
                pl.BlockSpec((self.H_pad, self.H_pad), lambda b, t: (0, 0)),
                pl.BlockSpec((1, self.H_pad), lambda b, t: (0, 0)),
                pl.BlockSpec((self.H_pad, self.C_OUT), lambda b, t: (0, 0)),
                pl.BlockSpec((1, self.C_OUT), lambda b, t: (0, 0)),
            ],
            out_specs=pl.BlockSpec((T_BLK, B_BLK, self.C_OUT),
                                   lambda b, t: (t, b, 0)),
            scratch_shapes=[
                pltpu.VMEM((B_BLK, self.H_pad), jnp.float32),               # h carry
                pltpu.VMEM((T_BLK, B_BLK, self.H_pad), jnp.float32),        # xproj / h
            ],
            compiler_params=pltpu.CompilerParams(
                dimension_semantics=("parallel", "arbitrary"),
                vmem_limit_bytes=32 * 1024 * 1024),
        )(ids_tm, self.w_emb_ih, self.w_hh_t, self.b_rnn, self.w_fc_t, self.b_fc)

        logits = jnp.transpose(out[:T, :B, 0:2], (1, 0, 2))       # [B, T, 2] f32
        preds = jnp.argmax(logits, axis=-1).astype(jnp.int32)     # ties -> class 0
        return logits, preds

    def __call__(self, x, y_true=None):
        logits, preds = self._logits_and_preds(x)
        if y_true is None:
            return preds
        # CrossEntropyLoss (mean over B*T) from kernel-produced logits.
        n_cls = logits.shape[-1]
        flat_logits = logits.reshape(-1, n_cls)
        flat_y = y_true.reshape(-1)
        logp = jax.nn.log_softmax(flat_logits, axis=-1)
        nll = -jnp.take_along_axis(logp, flat_y[:, None], axis=-1)[:, 0]
        return jnp.mean(nll)


# ----------------------------------- main -------------------------------------
if __name__ == "__main__":
    vocab_size, vector_num, hidden_size, max_length = 30, 16, 32, 8
    batch = 2

    key = jax.random.PRNGKey(0)
    k_model, k_x, k_y = jax.random.split(key, 3)

    model = RNNCutModelPallas(vocab_size, vector_num, hidden_size, max_length, k_model)

    x = jax.random.randint(k_x, (batch, max_length), 0, vocab_size, dtype=jnp.int32)
    y_true = jax.random.randint(k_y, (batch, max_length), 0, 2, dtype=jnp.int32)

    preds = model(x)            # inference branch (argmax)
    loss = model(x, y_true)     # training-metric branch (cross-entropy)

    jax.block_until_ready(preds)
    jax.block_until_ready(loss)

    assert preds.shape == (batch, max_length) and preds.dtype == jnp.int32
    assert bool(jnp.all((preds == 0) | (preds == 1)))
    assert loss.shape == () and jnp.isfinite(loss)
    print("KERNEL_OK")
</pallas_src>

<mosaic_0001>
module attributes {stable_mosaic.version = 11 : i64} {
  func.func @rnn_block_kernel(%arg0: i32, %arg1: i32, %arg2: memref<8x8x1xi32, #tpu.memory_space<vmem>>, %arg3: memref<128x128xbf16, #tpu.memory_space<vmem>>, %arg4: memref<128x128xbf16, #tpu.memory_space<vmem>>, %arg5: memref<1x128xf32, #tpu.memory_space<vmem>>, %arg6: memref<128x8xbf16, #tpu.memory_space<vmem>>, %arg7: memref<1x8xf32, #tpu.memory_space<vmem>>, %arg8: memref<8x8x8xf32, #tpu.memory_space<vmem>>, %arg9: memref<8x128xf32, #tpu.memory_space<vmem>>, %arg10: memref<8x8x128xf32, #tpu.memory_space<vmem>>) attributes {dimension_semantics = [#tpu.dimension_semantics<parallel>, #tpu.dimension_semantics<arbitrary>], iteration_bounds = array<i64: 1, 1>, scalar_prefetch = 0 : i64, scratch_operands = 2 : i64, tpu.core_type = #tpu.core_type<tc>, window_params = [{transform_indices = @transform_0, window_bounds = array<i64: 8, 8, 1>}, {pipeline_mode = #tpu.pipeline_mode<synchronous>, transform_indices = @transform_1, window_bounds = array<i64: 128, 128>}, {pipeline_mode = #tpu.pipeline_mode<synchronous>, transform_indices = @transform_2, window_bounds = array<i64: 128, 128>}, {pipeline_mode = #tpu.pipeline_mode<synchronous>, transform_indices = @transform_3, window_bounds = array<i64: 1, 128>}, {pipeline_mode = #tpu.pipeline_mode<synchronous>, transform_indices = @transform_4, window_bounds = array<i64: 128, 8>}, {pipeline_mode = #tpu.pipeline_mode<synchronous>, transform_indices = @transform_5, window_bounds = array<i64: 1, 8>}, {transform_indices = @transform_6, window_bounds = array<i64: 8, 8, 8>}]} {
    %c0_i32 = arith.constant 0 : i32
    %0 = arith.cmpi eq, %arg1, %c0_i32 : i32
    %1 = arith.extui %0 : i1 to i32
    %c0_i32_0 = arith.constant 0 : i32
    %2 = arith.cmpi ne, %1, %c0_i32_0 : i32
    scf.if %2 {
      %cst_68 = arith.constant 0.000000e+00 : f32
      %119 = vector.broadcast %cst_68 : f32 to vector<8x128xf32>
      %c0_69 = arith.constant 0 : index
      %c0_70 = arith.constant 0 : index
      %120 = vector.load %arg9[%c0_69, %c0_70] : memref<8x128xf32, #tpu.memory_space<vmem>>, vector<8x128xf32>
      tpu.vector_store %arg9[%c0_69, %c0_70], %119 {strides = array<i32>} : memref<8x128xf32, #tpu.memory_space<vmem>>, vector<8x128xf32>,
    } else {
    }
    %3 = tpu.iota {dimensions = array<i32: 2>} : vector<8x8x128xi32>
    %c0 = arith.constant 0 : index
    %c0_1 = arith.constant 0 : index
    %c0_2 = arith.constant 0 : index
    %4 = vector.load %arg2[%c0, %c0_1, %c0_2] : memref<8x8x1xi32, #tpu.memory_space<vmem>>, vector<8x8x1xi32>
    %5 = vector.broadcast %4 : vector<8x8x1xi32> to vector<8x8x128xi32>
    %6 = arith.cmpi eq, %3, %5 : vector<8x8x128xi32>
    %7 = arith.extui %6 : vector<8x8x128xi1> to vector<8x8x128xi32>
    %8 = arith.sitofp %7 : vector<8x8x128xi32> to vector<8x8x128xf32>
    %9 = arith.truncf %8 : vector<8x8x128xf32> to vector<8x8x128xbf16>
    %10 = vector.shape_cast %9 : vector<8x8x128xbf16> to vector<64x128xbf16>
    %c0_3 = arith.constant 0 : index
    %c0_4 = arith.constant 0 : index
    %11 = vector.load %arg3[%c0_3, %c0_4] : memref<128x128xbf16, #tpu.memory_space<vmem>>, vector<128x128xbf16>
    %cst = arith.constant dense<0.000000e+00> : vector<64x128xf32>
    %12 = tpu.matmul %10, %11, %cst {dimension_numbers = #tpu.dot_dimension_numbers<[1], [0], [0], [1], [0, 0, 1, 1], [], []>} : vector<64x128xbf16>, vector<128x128xbf16>, vector<64x128xf32> -> vector<64x128xf32>
    %c0_5 = arith.constant 0 : index
    %c0_6 = arith.constant 0 : index
    %13 = vector.load %arg5[%c0_5, %c0_6] : memref<1x128xf32, #tpu.memory_space<vmem>>, vector<1x128xf32>
    %14 = vector.broadcast %13 : vector<1x128xf32> to vector<64x128xf32>
    %15 = arith.addf %12, %14 : vector<64x128xf32>
    %16 = vector.shape_cast %15 : vector<64x128xf32> to vector<8x8x128xf32>
    %c0_7 = arith.constant 0 : index
    %c0_8 = arith.constant 0 : index
    %c0_9 = arith.constant 0 : index
    %17 = vector.load %arg10[%c0_7, %c0_8, %c0_9] : memref<8x8x128xf32, #tpu.memory_space<vmem>>, vector<8x8x128xf32>
    tpu.vector_store %arg10[%c0_7, %c0_8, %c0_9], %16 {strides = array<i32>} : memref<8x8x128xf32, #tpu.memory_space<vmem>>, vector<8x8x128xf32>,
    %c0_10 = arith.constant 0 : index
    %c0_11 = arith.constant 0 : index
    %18 = vector.load %arg4[%c0_10, %c0_11] : memref<128x128xbf16, #tpu.memory_space<vmem>>, vector<128x128xbf16>
    %c0_12 = arith.constant 0 : index
    %c0_13 = arith.constant 0 : index
    %19 = vector.load %arg9[%c0_12, %c0_13] : memref<8x128xf32, #tpu.memory_space<vmem>>, vector<8x128xf32>
    %c0_i32_14 = arith.constant 0 : i32
    %20 = arith.index_cast %c0_i32_14 : i32 to index
    %c0_15 = arith.constant 0 : index
    %c0_16 = arith.constant 0 : index
    %21 = vector.load %arg10[%20, %c0_15, %c0_16] : memref<8x8x128xf32, #tpu.memory_space<vmem>>, vector<1x8x128xf32>
    %22 = vector.shape_cast %21 : vector<1x8x128xf32> to vector<8x128xf32>
    %23 = arith.truncf %19 : vector<8x128xf32> to vector<8x128xbf16>
    %cst_17 = arith.constant dense<0.000000e+00> : vector<8x128xf32>
    %24 = tpu.matmul %23, %18, %cst_17 {dimension_numbers = #tpu.dot_dimension_numbers<[1], [0], [0], [1], [0, 0, 1, 1], [], []>} : vector<8x128xbf16>, vector<128x128xbf16>, vector<8x128xf32> -> vector<8x128xf32>
    %25 = arith.addf %22, %24 : vector<8x128xf32>
    %26 = math.tanh %25 : vector<8x128xf32>
    %27 = arith.index_cast %c0_i32_14 : i32 to index
    %c0_18 = arith.constant 0 : index
    %c0_19 = arith.constant 0 : index
    %28 = vector.load %arg10[%27, %c0_18, %c0_19] : memref<8x8x128xf32, #tpu.memory_space<vmem>>, vector<1x8x128xf32>
    %29 = vector.shape_cast %28 : vector<1x8x128xf32> to vector<8x128xf32>
    %30 = vector.shape_cast %26 : vector<8x128xf32> to vector<1x8x128xf32>
    tpu.vector_store %arg10[%27, %c0_18, %c0_19], %30 {strides = array<i32>} : memref<8x8x128xf32, #tpu.memory_space<vmem>>, vector<1x8x128xf32>,
    %c1_i32 = arith.constant 1 : i32
    %31 = arith.index_cast %c1_i32 : i32 to index
    %c0_20 = arith.constant 0 : index
    %c0_21 = arith.constant 0 : index
    %32 = vector.load %arg10[%31, %c0_20, %c0_21] : memref<8x8x128xf32, #tpu.memory_space<vmem>>, vector<1x8x128xf32>
    %33 = vector.shape_cast %32 : vector<1x8x128xf32> to vector<8x128xf32>
    %34 = arith.truncf %26 : vector<8x128xf32> to vector<8x128xbf16>
    %cst_22 = arith.constant dense<0.000000e+00> : vector<8x128xf32>
    %35 = tpu.matmul %34, %18, %cst_22 {dimension_numbers = #tpu.dot_dimension_numbers<[1], [0], [0], [1], [0, 0, 1, 1], [], []>} : vector<8x128xbf16>, vector<128x128xbf16>, vector<8x128xf32> -> vector<8x128xf32>
    %36 = arith.addf %33, %35 : vector<8x128xf32>
    %37 = math.tanh %36 : vector<8x128xf32>
    %38 = arith.index_cast %c1_i32 : i32 to index
    %c0_23 = arith.constant 0 : index
    %c0_24 = arith.constant 0 : index
    %39 = vector.load %arg10[%38, %c0_23, %c0_24] : memref<8x8x128xf32, #tpu.memory_space<vmem>>, vector<1x8x128xf32>
    %40 = vector.shape_cast %39 : vector<1x8x128xf32> to vector<8x128xf32>
    %41 = vector.shape_cast %37 : vector<8x128xf32> to vector<1x8x128xf32>
    tpu.vector_store %arg10[%38, %c0_23, %c0_24], %41 {strides = array<i32>} : memref<8x8x128xf32, #tpu.memory_space<vmem>>, vector<1x8x128xf32>,
    %c2_i32 = arith.constant 2 : i32
    %42 = arith.index_cast %c2_i32 : i32 to index
    %c0_25 = arith.constant 0 : index
    %c0_26 = arith.constant 0 : index
    %43 = vector.load %arg10[%42, %c0_25, %c0_26] : memref<8x8x128xf32, #tpu.memory_space<vmem>>, vector<1x8x128xf32>
    %44 = vector.shape_cast %43 : vector<1x8x128xf32> to vector<8x128xf32>
    %45 = arith.truncf %37 : vector<8x128xf32> to vector<8x128xbf16>
    %cst_27 = arith.constant dense<0.000000e+00> : vector<8x128xf32>
    %46 = tpu.matmul %45, %18, %cst_27 {dimension_numbers = #tpu.dot_dimension_numbers<[1], [0], [0], [1], [0, 0, 1, 1], [], []>} : vector<8x128xbf16>, vector<128x128xbf16>, vector<8x128xf32> -> vector<8x128xf32>
    %47 = arith.addf %44, %46 : vector<8x128xf32>
    %48 = math.tanh %47 : vector<8x128xf32>
    %49 = arith.index_cast %c2_i32 : i32 to index
    %c0_28 = arith.constant 0 : index
    %c0_29 = arith.constant 0 : index
    %50 = vector.load %arg10[%49, %c0_28, %c0_29] : memref<8x8x128xf32, #tpu.memory_space<vmem>>, vector<1x8x128xf32>
    %51 = vector.shape_cast %50 : vector<1x8x128xf32> to vector<8x128xf32>
    %52 = vector.shape_cast %48 : vector<8x128xf32> to vector<1x8x128xf32>
    tpu.vector_store %arg10[%49, %c0_28, %c0_29], %52 {strides = array<i32>} : memref<8x8x128xf32, #tpu.memory_space<vmem>>, vector<1x8x128xf32>,
    %c3_i32 = arith.constant 3 : i32
    %53 = arith.index_cast %c3_i32 : i32 to index
    %c0_30 = arith.constant 0 : index
    %c0_31 = arith.constant 0 : index
    %54 = vector.load %arg10[%53, %c0_30, %c0_31] : memref<8x8x128xf32, #tpu.memory_space<vmem>>, vector<1x8x128xf32>
    %55 = vector.shape_cast %54 : vector<1x8x128xf32> to vector<8x128xf32>
    %56 = arith.truncf %48 : vector<8x128xf32> to vector<8x128xbf16>
    %cst_32 = arith.constant dense<0.000000e+00> : vector<8x128xf32>
    %57 = tpu.matmul %56, %18, %cst_32 {dimension_numbers = #tpu.dot_dimension_numbers<[1], [0], [0], [1], [0, 0, 1, 1], [], []>} : vector<8x128xbf16>, vector<128x128xbf16>, vector<8x128xf32> -> vector<8x128xf32>
    %58 = arith.addf %55, %57 : vector<8x128xf32>
    %59 = math.tanh %58 : vector<8x128xf32>
    %60 = arith.index_cast %c3_i32 : i32 to index
    %c0_33 = arith.constant 0 : index
    %c0_34 = arith.constant 0 : index
    %61 = vector.load %arg10[%60, %c0_33, %c0_34] : memref<8x8x128xf32, #tpu.memory_space<vmem>>, vector<1x8x128xf32>
    %62 = vector.shape_cast %61 : vector<1x8x128xf32> to vector<8x128xf32>
    %63 = vector.shape_cast %59 : vector<8x128xf32> to vector<1x8x128xf32>
    tpu.vector_store %arg10[%60, %c0_33, %c0_34], %63 {strides = array<i32>} : memref<8x8x128xf32, #tpu.memory_space<vmem>>, vector<1x8x128xf32>,
    %c4_i32 = arith.constant 4 : i32
    %64 = arith.index_cast %c4_i32 : i32 to index
    %c0_35 = arith.constant 0 : index
    %c0_36 = arith.constant 0 : index
    %65 = vector.load %arg10[%64, %c0_35, %c0_36] : memref<8x8x128xf32, #tpu.memory_space<vmem>>, vector<1x8x128xf32>
    %66 = vector.shape_cast %65 : vector<1x8x128xf32> to vector<8x128xf32>
    %67 = arith.truncf %59 : vector<8x128xf32> to vector<8x128xbf16>
    %cst_37 = arith.constant dense<0.000000e+00> : vector<8x128xf32>
    %68 = tpu.matmul %67, %18, %cst_37 {dimension_numbers = #tpu.dot_dimension_numbers<[1], [0], [0], [1], [0, 0, 1, 1], [], []>} : vector<8x128xbf16>, vector<128x128xbf16>, vector<8x128xf32> -> vector<8x128xf32>
    %69 = arith.addf %66, %68 : vector<8x128xf32>
    %70 = math.tanh %69 : vector<8x128xf32>
    %71 = arith.index_cast %c4_i32 : i32 to index
    %c0_38 = arith.constant 0 : index
    %c0_39 = arith.constant 0 : index
    %72 = vector.load %arg10[%71, %c0_38, %c0_39] : memref<8x8x128xf32, #tpu.memory_space<vmem>>, vector<1x8x128xf32>
    %73 = vector.shape_cast %72 : vector<1x8x128xf32> to vector<8x128xf32>
    %74 = vector.shape_cast %70 : vector<8x128xf32> to vector<1x8x128xf32>
    tpu.vector_store %arg10[%71, %c0_38, %c0_39], %74 {strides = array<i32>} : memref<8x8x128xf32, #tpu.memory_space<vmem>>, vector<1x8x128xf32>,
    %c5_i32 = arith.constant 5 : i32
    %75 = arith.index_cast %c5_i32 : i32 to index
    %c0_40 = arith.constant 0 : index
    %c0_41 = arith.constant 0 : index
    %76 = vector.load %arg10[%75, %c0_40, %c0_41] : memref<8x8x128xf32, #tpu.memory_space<vmem>>, vector<1x8x128xf32>
    %77 = vector.shape_cast %76 : vector<1x8x128xf32> to vector<8x128xf32>
    %78 = arith.truncf %70 : vector<8x128xf32> to vector<8x128xbf16>
    %cst_42 = arith.constant dense<0.000000e+00> : vector<8x128xf32>
    %79 = tpu.matmul %78, %18, %cst_42 {dimension_numbers = #tpu.dot_dimension_numbers<[1], [0], [0], [1], [0, 0, 1, 1], [], []>} : vector<8x128xbf16>, vector<128x128xbf16>, vector<8x128xf32> -> vector<8x128xf32>
    %80 = arith.addf %77, %79 : vector<8x128xf32>
    %81 = math.tanh %80 : vector<8x128xf32>
    %82 = arith.index_cast %c5_i32 : i32 to index
    %c0_43 = arith.constant 0 : index
    %c0_44 = arith.constant 0 : index
    %83 = vector.load %arg10[%82, %c0_43, %c0_44] : memref<8x8x128xf32, #tpu.memory_space<vmem>>, vector<1x8x128xf32>
    %84 = vector.shape_cast %83 : vector<1x8x128xf32> to vector<8x128xf32>
    %85 = vector.shape_cast %81 : vector<8x128xf32> to vector<1x8x128xf32>
    tpu.vector_store %arg10[%82, %c0_43, %c0_44], %85 {strides = array<i32>} : memref<8x8x128xf32, #tpu.memory_space<vmem>>, vector<1x8x128xf32>,
    %c6_i32 = arith.constant 6 : i32
    %86 = arith.index_cast %c6_i32 : i32 to index
    %c0_45 = arith.constant 0 : index
    %c0_46 = arith.constant 0 : index
    %87 = vector.load %arg10[%86, %c0_45, %c0_46] : memref<8x8x128xf32, #tpu.memory_space<vmem>>, vector<1x8x128xf32>
    %88 = vector.shape_cast %87 : vector<1x8x128xf32> to vector<8x128xf32>
    %89 = arith.truncf %81 : vector<8x128xf32> to vector<8x128xbf16>
    %cst_47 = arith.constant dense<0.000000e+00> : vector<8x128xf32>
    %90 = tpu.matmul %89, %18, %cst_47 {dimension_numbers = #tpu.dot_dimension_numbers<[1], [0], [0], [1], [0, 0, 1, 1], [], []>} : vector<8x128xbf16>, vector<128x128xbf16>, vector<8x128xf32> -> vector<8x128xf32>
    %91 = arith.addf %88, %90 : vector<8x128xf32>
    %92 = math.tanh %91 : vector<8x128xf32>
    %93 = arith.index_cast %c6_i32 : i32 to index
    %c0_48 = arith.constant 0 : index
    %c0_49 = arith.constant 0 : index
    %94 = vector.load %arg10[%93, %c0_48, %c0_49] : memref<8x8x128xf32, #tpu.memory_space<vmem>>, vector<1x8x128xf32>
    %95 = vector.shape_cast %94 : vector<1x8x128xf32> to vector<8x128xf32>
    %96 = vector.shape_cast %92 : vector<8x128xf32> to vector<1x8x128xf32>
    tpu.vector_store %arg10[%93, %c0_48, %c0_49], %96 {strides = array<i32>} : memref<8x8x128xf32, #tpu.memory_space<vmem>>, vector<1x8x128xf32>,
    %c7_i32 = arith.constant 7 : i32
    %97 = arith.index_cast %c7_i32 : i32 to index
    %c0_50 = arith.constant 0 : index
    %c0_51 = arith.constant 0 : index
    %98 = vector.load %arg10[%97, %c0_50, %c0_51] : memref<8x8x128xf32, #tpu.memory_space<vmem>>, vector<1x8x128xf32>
    %99 = vector.shape_cast %98 : vector<1x8x128xf32> to vector<8x128xf32>
    %100 = arith.truncf %92 : vector<8x128xf32> to vector<8x128xbf16>
    %cst_52 = arith.constant dense<0.000000e+00> : vector<8x128xf32>
    %101 = tpu.matmul %100, %18, %cst_52 {dimension_numbers = #tpu.dot_dimension_numbers<[1], [0], [0], [1], [0, 0, 1, 1], [], []>} : vector<8x128xbf16>, vector<128x128xbf16>, vector<8x128xf32> -> vector<8x128xf32>
    %102 = arith.addf %99, %101 : vector<8x128xf32>
    %103 = math.tanh %102 : vector<8x128xf32>
    %104 = arith.index_cast %c7_i32 : i32 to index
    %c0_53 = arith.constant 0 : index
    %c0_54 = arith.constant 0 : index
    %105 = vector.load %arg10[%104, %c0_53, %c0_54] : memref<8x8x128xf32, #tpu.memory_space<vmem>>, vector<1x8x128xf32>
    %106 = vector.shape_cast %105 : vector<1x8x128xf32> to vector<8x128xf32>
    %107 = vector.shape_cast %103 : vector<8x128xf32> to vector<1x8x128xf32>
    tpu.vector_store %arg10[%104, %c0_53, %c0_54], %107 {strides = array<i32>} : memref<8x8x128xf32, #tpu.memory_space<vmem>>, vector<1x8x128xf32>,
    %c8_i32 = arith.constant 8 : i32
    %c0_55 = arith.constant 0 : index
    %c0_56 = arith.constant 0 : index
    %108 = vector.load %arg9[%c0_55, %c0_56] : memref<8x128xf32, #tpu.memory_space<vmem>>, vector<8x128xf32>
    tpu.vector_store %arg9[%c0_55, %c0_56], %103 {strides = array<i32>} : memref<8x128xf32, #tpu.memory_space<vmem>>, vector<8x128xf32>,
    %c0_57 = arith.constant 0 : index
    %c0_58 = arith.constant 0 : index
    %c0_59 = arith.constant 0 : index
    %109 = vector.load %arg10[%c0_57, %c0_58, %c0_59] : memref<8x8x128xf32, #tpu.memory_space<vmem>>, vector<8x8x128xf32>
    %110 = vector.shape_cast %109 : vector<8x8x128xf32> to vector<64x128xf32>
    %111 = arith.truncf %110 : vector<64x128xf32> to vector<64x128xbf16>
    %c0_60 = arith.constant 0 : index
    %c0_61 = arith.constant 0 : index
    %112 = vector.load %arg6[%c0_60, %c0_61] : memref<128x8xbf16, #tpu.memory_space<vmem>>, vector<128x8xbf16>
    %cst_62 = arith.constant dense<0.000000e+00> : vector<64x8xf32>
    %113 = tpu.matmul %111, %112, %cst_62 {dimension_numbers = #tpu.dot_dimension_numbers<[1], [0], [0], [1], [0, 0, 1, 1], [], []>} : vector<64x128xbf16>, vector<128x8xbf16>, vector<64x8xf32> -> vector<64x8xf32>
    %c0_63 = arith.constant 0 : index
    %c0_64 = arith.constant 0 : index
    %114 = vector.load %arg7[%c0_63, %c0_64] : memref<1x8xf32, #tpu.memory_space<vmem>>, vector<1x8xf32>
    %115 = vector.broadcast %114 : vector<1x8xf32> to vector<64x8xf32>
    %116 = arith.addf %113, %115 : vector<64x8xf32>
    %117 = vector.shape_cast %116 : vector<64x8xf32> to vector<8x8x8xf32>
    %c0_65 = arith.constant 0 : index
    %c0_66 = arith.constant 0 : index
    %c0_67 = arith.constant 0 : index
    %118 = vector.load %arg8[%c0_65, %c0_66, %c0_67] : memref<8x8x8xf32, #tpu.memory_space<vmem>>, vector<8x8x8xf32>
    tpu.vector_store %arg8[%c0_65, %c0_66, %c0_67], %117 {strides = array<i32>} : memref<8x8x8xf32, #tpu.memory_space<vmem>>, vector<8x8x8xf32>,
    return
  }
  func.func @transform_0(%arg0: i32, %arg1: i32) -> (i32, i32, i32) {
    %c0_i32 = arith.constant 0 : i32
    %c0_i32_0 = arith.constant 0 : i32
    return %arg1, %arg0, %c0_i32 : i32, i32, i32
  }
  func.func @transform_1(%arg0: i32, %arg1: i32) -> (i32, i32) {
    %c0_i32 = arith.constant 0 : i32
    %c0_i32_0 = arith.constant 0 : i32
    %c0_i32_1 = arith.constant 0 : i32
    return %c0_i32, %c0_i32_0 : i32, i32
  }
  func.func @transform_2(%arg0: i32, %arg1: i32) -> (i32, i32) {
    %c0_i32 = arith.constant 0 : i32
    %c0_i32_0 = arith.constant 0 : i32
    %c0_i32_1 = arith.constant 0 : i32
    return %c0_i32, %c0_i32_0 : i32, i32
  }
  func.func @transform_3(%arg0: i32, %arg1: i32) -> (i32, i32) {
    %c0_i32 = arith.constant 0 : i32
    %c0_i32_0 = arith.constant 0 : i32
    %c0_i32_1 = arith.constant 0 : i32
    return %c0_i32, %c0_i32_0 : i32, i32
  }
  func.func @transform_4(%arg0: i32, %arg1: i32) -> (i32, i32) {
    %c0_i32 = arith.constant 0 : i32
    %c0_i32_0 = arith.constant 0 : i32
    %c0_i32_1 = arith.constant 0 : i32
    return %c0_i32, %c0_i32_0 : i32, i32
  }
  func.func @transform_5(%arg0: i32, %arg1: i32) -> (i32, i32) {
    %c0_i32 = arith.constant 0 : i32
    %c0_i32_0 = arith.constant 0 : i32
    %c0_i32_1 = arith.constant 0 : i32
    return %c0_i32, %c0_i32_0 : i32, i32
  }
  func.func @transform_6(%arg0: i32, %arg1: i32) -> (i32, i32, i32) {
    %c0_i32 = arith.constant 0 : i32
    %c0_i32_0 = arith.constant 0 : i32
    return %arg1, %arg0, %c0_i32 : i32, i32, i32
  }
}

</mosaic_0001>

<llo_original>
// kernel: _logits_and_preds.1
$region0: #{_logits_and_preds.1}
  #allocation0 [shape = 'u32[]', space=smem, size = 0x4, offset = 0x4, fixed_abs, tag = 'smem constant byte address 0x4 - core index']
  #allocation1 [shape = 'u32[72,128]{1,0:T(1,128)}', space=vmem, size = 0x9000, scoped, tag = 'internal scratch']
  #allocation2 [shape = 'f32[8,128]{1,0:T(8,128)}', space=vmem, size = 0x1000, scoped, tag = 'scratch operand']
  #allocation3 [shape = 'f32[8,8,128]{2,1,0:T(8,128)}', space=vmem, size = 0x8000, scoped, tag = 'scratch operand']
  %s0 = inlined_call_operand.vmem [shape: s32[8,8,1], index: 0, kind: input, shape index: {}]
  %s1 = inlined_call_operand.hbm [shape: bf16[128,128], index: 1, kind: input, shape index: {}]
  %s2 = inlined_call_operand.hbm [shape: bf16[128,128], index: 2, kind: input, shape index: {}]
  %s3 = inlined_call_operand.vmem [shape: f32[1,128], index: 3, kind: input, shape index: {}]
  %s4 = inlined_call_operand.vmem [shape: bf16[128,8], index: 4, kind: input, shape index: {}]
  %s5 = inlined_call_operand.vmem [shape: f32[1,8], index: 5, kind: input, shape index: {}]
  %s6 = inlined_call_operand.vmem [shape: f32[8,8,8], index: 6, kind: output, shape index: {}]
  %s7 = sld [smem:[#allocation0]]
  $region46: #{_logits_and_preds.1} parent=0
    _
  %s9 = ssub.s32 1, %s7
  %s10 = scalar_select 0, %s9, %s7
  $region1: #{_logits_and_preds.1} parent=0
    #allocation4 [shape = 'u8[32768]{0}', space=vmem, size = 0x8000, scoped, tag = 'input window, operand 1, single buffered']
    #allocation5 [shape = 's32[1]{0}', space=sflag, size = 0x4, scoped, tag = 'scoped memory for _logits_and_preds.1']
    #allocation6 [shape = 'u8[32768]{0}', space=vmem, size = 0x8000, scoped, tag = 'input window, operand 2, single buffered']
    #allocation7 [shape = 's32[1]{0}', space=sflag, size = 0x4, scoped, tag = 'scoped memory for _logits_and_preds.1']
    %11 = vsyncpa [#allocation5], 0
    %12 = vsyncpa [#allocation7], 0
    // Predicated region
    $region2: #{_logits_and_preds.1} parent=1 // pred_check
      _
    $region3: #{_logits_and_preds.1} parent=1 // pred_check_branch
      %14 = sbr.rel (0) target = $region5
    $region4: #{_logits_and_preds.1} parent=1 // pred_region
      _
    $region5: #{_logits_and_preds.1} parent=1 // pred_fallthru
      _
    // Predicated region
    $region6: #{_logits_and_preds.1} parent=1 // pred_check
      _
    $region7: #{_logits_and_preds.1} parent=1 // pred_check_branch
      %16 = sbr.rel (0) target = $region9
    $region8: #{_logits_and_preds.1} parent=1 // pred_region
      %18 = vsyncadd [#allocation5], 0
      %s19 = sshll.u32 %s1, 4
      %s20 = int_to_ptr.hbm [resolvable:$true] %s19
      %s21 = sshll.u32 [#allocation4], 4
      %s22 = int_to_ptr.vmem [resolvable:$true] %s21
      %27 = dma.hbm_to_vmem [thread:$0]  %s20, 1024, %s22, [#allocation5], 64, 64, 4
    $region9: #{_logits_and_preds.1} parent=1 // pred_fallthru
      _
    // Predicated region
    $region10: #{_logits_and_preds.1} parent=1 // pred_check
      _
    $region11: #{_logits_and_preds.1} parent=1 // pred_check_branch
      %29 = sbr.rel (0) target = $region13
    $region12: #{_logits_and_preds.1} parent=1 // pred_region
      %31 = vsyncadd [#allocation7], 0
      %s32 = sshll.u32 %s2, 4
      %s33 = int_to_ptr.hbm [resolvable:$true] %s32
      %s34 = sshll.u32 [#allocation6], 4
      %s35 = int_to_ptr.vmem [resolvable:$true] %s34
      %40 = dma.hbm_to_vmem [thread:$0]  %s33, 1024, %s35, [#allocation7], 64, 64, 4
    $region13: #{_logits_and_preds.1} parent=1 // pred_fallthru
      _
    // Predicated region
    $region14: #{_logits_and_preds.1} parent=1 // pred_check
      _
    $region15: #{_logits_and_preds.1} parent=1 // pred_check_branch
      %42 = sbr.rel (0) target = $region17
    $region16: #{_logits_and_preds.1} parent=1 // pred_region
      _
    $region17: #{_logits_and_preds.1} parent=1 // pred_fallthru
      _
    // Predicated region
    $region18: #{_logits_and_preds.1} parent=1 // pred_check
      _
    $region19: #{_logits_and_preds.1} parent=1 // pred_check_branch
      %44 = sbr.rel (0) target = $region21
    $region20: #{_logits_and_preds.1} parent=1 // pred_region
      _
    $region21: #{_logits_and_preds.1} parent=1 // pred_fallthru
      _
    // Predicated region
    $region22: #{_logits_and_preds.1} parent=1 // pred_check
      _
    $region23: #{_logits_and_preds.1} parent=1 // pred_check_branch
      %46 = sbr.rel (0) target = $region25
    $region24: #{_logits_and_preds.1} parent=1 // pred_region
      _
    $region25: #{_logits_and_preds.1} parent=1 // pred_fallthru
      _
    // Predicated region
    $region26: #{_logits_and_preds.1} parent=1 // pred_check
      _
    $region27: #{_logits_and_preds.1} parent=1 // pred_check_branch
      %48 = sbr.rel (0) target = $region29
    $region28: #{_logits_and_preds.1} parent=1 // pred_region
      %50 = dma.done [#allocation5], 1024
    $region29: #{_logits_and_preds.1} parent=1 // pred_fallthru
      _
    // Predicated region
    $region30: #{_logits_and_preds.1} parent=1 // pred_check
      _
    $region31: #{_logits_and_preds.1} parent=1 // pred_check_branch
      %52 = sbr.rel (0) target = $region33
    $region32: #{_logits_and_preds.1} parent=1 // pred_region
      %54 = dma.done [#allocation7], 1024
    $region33: #{_logits_and_preds.1} parent=1 // pred_fallthru
      _
    %p55 = scmp.eq.s32.totalorder 0, 0
    // Predicated region
    $region34: #{_logits_and_preds.1} parent=1 // pred_check
      %p56 = pneg %p55
    $region35: #{_logits_and_preds.1} parent=1 // pred_check_branch
      %58 = sbr.rel (%p56) target = $region37
    $region36: #{_logits_and_preds.1} parent=1 // pred_region
      %59 = vst [vmem:[#allocation2] sm:$0xff] 0.0
    $region37: #{_logits_and_preds.1} parent=1 // pred_fallthru
      _
    %v60 = vlaneseq
    %v61 = vand.u32 %v60, 127
    %v62 = vld [vmem:[%s0] sm:$0xff]
    %v63 = vld [vmem:[%s0 + $0x8] sm:$0xff]
    %v64 = vld [vmem:[%s0 + $0x10] sm:$0xff]
    %v65 = vld [vmem:[%s0 + $0x18] sm:$0xff]
    %v66 = vld [vmem:[%s0 + $0x20] sm:$0xff]
    %v67 = vld [vmem:[%s0 + $0x28] sm:$0xff]
    %v68 = vld [vmem:[%s0 + $0x30] sm:$0xff]
    %v69 = vld [vmem:[%s0 + $0x38] sm:$0xff]
    %70 = vset.pattern.permute.xlu0 0
    %71 = vperm.xlu0 %70, %v62
    %v72 = vpop.permute.xlu0 %71
    %73 = vset.pattern.permute.xlu0 0
    %74 = vperm.xlu0 %73, %v63
    %v75 = vpop.permute.xlu0 %74
    %76 = vset.pattern.permute.xlu0 0
    %77 = vperm.xlu0 %76, %v64
    %v78 = vpop.permute.xlu0 %77
    %79 = vset.pattern.permute.xlu0 0
    %80 = vperm.xlu0 %79, %v65
    %v81 = vpop.permute.xlu0 %80
    %82 = vset.pattern.permute.xlu0 0
    %83 = vperm.xlu0 %82, %v66
    %v84 = vpop.permute.xlu0 %83
    %85 = vset.pattern.permute.xlu0 0
    %86 = vperm.xlu0 %85, %v67
    %v87 = vpop.permute.xlu0 %86
    %88 = vset.pattern.permute.xlu0 0
    %89 = vperm.xlu0 %88, %v68
    %v90 = vpop.permute.xlu0 %89
    %91 = vset.pattern.permute.xlu0 0
    %92 = vperm.xlu0 %91, %v69
    %v93 = vpop.permute.xlu0 %92
    %vm94 = vcmp.eq.s32.totalorder %v61, %v72
    %vm95 = vcmp.eq.s32.totalorder %v61, %v75
    %vm96 = vcmp.eq.s32.totalorder %v61, %v78
    %vm97 = vcmp.eq.s32.totalorder %v61, %v81
    %vm98 = vcmp.eq.s32.totalorder %v61, %v84
    %vm99 = vcmp.eq.s32.totalorder %v61, %v87
    %vm100 = vcmp.eq.s32.totalorder %v61, %v90
    %vm101 = vcmp.eq.s32.totalorder %v61, %v93
    %v102 = vsel %vm94, 1, 0
    %v103 = vsel %vm95, 1, 0
    %v104 = vsel %vm96, 1, 0
    %v105 = vsel %vm97, 1, 0
    %v106 = vsel %vm98, 1, 0
    %v107 = vsel %vm99, 1, 0
    %v108 = vsel %vm100, 1, 0
    %v109 = vsel %vm101, 1, 0
    %v110 = vcvt.s32.f32 %v102
    %v111 = vcvt.s32.f32 %v103
    %v112 = vcvt.s32.f32 %v104
    %v113 = vcvt.s32.f32 %v105
    %v114 = vcvt.s32.f32 %v106
    %v115 = vcvt.s32.f32 %v107
    %v116 = vcvt.s32.f32 %v108
    %v117 = vcvt.s32.f32 %v109
    %v118 = vpack.c.bf16 %v110, %v110
    %v119 = vpack.c.bf16 %v111, %v111
    %v120 = vpack.c.bf16 %v112, %v112
    %v121 = vpack.c.bf16 %v113, %v113
    %v122 = vpack.c.bf16 %v114, %v114
    %v123 = vpack.c.bf16 %v115, %v115
    %v124 = vpack.c.bf16 %v116, %v116
    %v125 = vpack.c.bf16 %v117, %v117
    %v126 = vld [vmem:[#allocation4] sm:$0xf]
    %v127 = vld [vmem:[#allocation4 + $0x4] sm:$0xf]
    %v128 = vld [vmem:[#allocation4 + $0x8] sm:$0xf]
    %v129 = vld [vmem:[#allocation4 + $0xc] sm:$0xf]
    %v130 = vld [vmem:[#allocation4 + $0x10] sm:$0xf]
    %v131 = vld [vmem:[#allocation4 + $0x14] sm:$0xf]
    %v132 = vld [vmem:[#allocation4 + $0x18] sm:$0xf]
    %v133 = vld [vmem:[#allocation4 + $0x1c] sm:$0xf]
    %v134 = vld [vmem:[#allocation4 + $0x20] sm:$0xf]
    %v135 = vld [vmem:[#allocation4 + $0x24] sm:$0xf]
    %v136 = vld [vmem:[#allocation4 + $0x28] sm:$0xf]
    %v137 = vld [vmem:[#allocation4 + $0x2c] sm:$0xf]
    %v138 = vld [vmem:[#allocation4 + $0x30] sm:$0xf]
    %v139 = vld [vmem:[#allocation4 + $0x34] sm:$0xf]
    %v140 = vld [vmem:[#allocation4 + $0x38] sm:$0xf]
    %v141 = vld [vmem:[#allocation4 + $0x3c] sm:$0xf]
    %v142 = vld [vmem:[%s3] sm:$0x1]
    %v144 = vperm.slane %v142, 0
    %v154 = vunpack.c.l.b16 %v118
    %v155 = vunpack.c.l.b16 %v119
    %v156 = vunpack.c.l.b16 %v120
    %v157 = vunpack.c.l.b16 %v121
    %v158 = vunpack.c.l.b16 %v122
    %v159 = vunpack.c.l.b16 %v123
    %v160 = vunpack.c.l.b16 %v124
    %v161 = vunpack.c.l.b16 %v125
    %v162 = vpack.c.b16 %v155, %v154
    %v163 = vpack.c.b16 %v157, %v156
    %v164 = vpack.c.b16 %v159, %v158
    %v165 = vpack.c.b16 %v161, %v160
    %v186 = vunpack.c.l.b16 %v126
    %v187 = vunpack.c.l.b16 %v127
    %v188 = vunpack.c.l.b16 %v128
    %v189 = vunpack.c.l.b16 %v129
    %v190 = vunpack.c.l.b16 %v130
    %v191 = vunpack.c.l.b16 %v131
    %v192 = vunpack.c.l.b16 %v132
    %v193 = vunpack.c.l.b16 %v133
    %v194 = vunpack.c.l.b16 %v134
    %v195 = vunpack.c.l.b16 %v135
    %v196 = vunpack.c.l.b16 %v136
    %v197 = vunpack.c.l.b16 %v137
    %v198 = vunpack.c.l.b16 %v138
    %v199 = vunpack.c.l.b16 %v139
    %v200 = vunpack.c.l.b16 %v140
    %v201 = vunpack.c.l.b16 %v141
    %v202 = vpack.c.b16 %v187, %v186
    %v203 = vpack.c.b16 %v189, %v188
    %v204 = vpack.c.b16 %v191, %v190
    %v205 = vpack.c.b16 %v193, %v192
    %v206 = vpack.c.b16 %v195, %v194
    %v207 = vpack.c.b16 %v197, %v196
    %v208 = vpack.c.b16 %v199, %v198
    %v209 = vpack.c.b16 %v201, %v200
    %218 = vmatpush.bf16.msra.mxu0 %v209
    %219 = vmatpush.bf16.msra.mxu0 %v208
    %220 = vmatpush.bf16.msra.mxu0 %v207
    %221 = vmatpush.bf16.msra.mxu0 %v206
    %222 = vmatpush.bf16.msra.mxu0 %v205
    %223 = vmatpush.bf16.msra.mxu0 %v204
    %224 = vmatpush.bf16.msra.mxu0 %v203
    %225 = vmatpush.bf16.msra.mxu0 %v202
    %226 = vmatmul.bf16.gmra.mxu0 %v162
    %v227 = vpop.f32.mrf.mxu0
    %v228 = vadd.f32 %v144, %v227
    %v229 = vpop.f32.mrf.mxu0
    %v230 = vadd.f32 %v144, %v229
    %231 = vmatmul.bf16.gmra.mxu0 %v163
    %v232 = vpop.f32.mrf.mxu0
    %v233 = vadd.f32 %v144, %v232
    %v234 = vpop.f32.mrf.mxu0
    %v235 = vadd.f32 %v144, %v234
    %236 = vmatmul.bf16.gmra.mxu0 %v164
    %v237 = vpop.f32.mrf.mxu0
    %v238 = vadd.f32 %v144, %v237
    %v239 = vpop.f32.mrf.mxu0
    %v240 = vadd.f32 %v144, %v239
    %241 = vmatmul.bf16.gmra.mxu0 %v165
    %v242 = vpop.f32.mrf.mxu0
    %v243 = vadd.f32 %v144, %v242
    %v244 = vpop.f32.mrf.mxu0
    %v245 = vadd.f32 %v144, %v244
    %246 = vdwg.mxu0
    %247 = vst [vmem:[#allocation3] sm:$0xff] %v228
    %248 = vst [vmem:[#allocation3 + $0x8] sm:$0xff] %v230
    %249 = vst [vmem:[#allocation3 + $0x10] sm:$0xff] %v233
    %250 = vst [vmem:[#allocation3 + $0x18] sm:$0xff] %v235
    %251 = vst [vmem:[#allocation3 + $0x20] sm:$0xff] %v238
    %252 = vst [vmem:[#allocation3 + $0x28] sm:$0xff] %v240
    %253 = vst [vmem:[#allocation3 + $0x30] sm:$0xff] %v243
    %254 = vst [vmem:[#allocation3 + $0x38] sm:$0xff] %v245
    %v255 = vld [vmem:[#allocation6] sm:$0xf]
    %v256 = vld [vmem:[#allocation6 + $0x4] sm:$0xf]
    %v257 = vld [vmem:[#allocation6 + $0x8] sm:$0xf]
    %v258 = vld [vmem:[#allocation6 + $0xc] sm:$0xf]
    %v259 = vld [vmem:[#allocation6 + $0x10] sm:$0xf]
    %v260 = vld [vmem:[#allocation6 + $0x14] sm:$0xf]
    %v261 = vld [vmem:[#allocation6 + $0x18] sm:$0xf]
    %v262 = vld [vmem:[#allocation6 + $0x1c] sm:$0xf]
    %v263 = vld [vmem:[#allocation6 + $0x20] sm:$0xf]
    %v264 = vld [vmem:[#allocation6 + $0x24] sm:$0xf]
    %v265 = vld [vmem:[#allocation6 + $0x28] sm:$0xf]
    %v266 = vld [vmem:[#allocation6 + $0x2c] sm:$0xf]
    %v267 = vld [vmem:[#allocation6 + $0x30] sm:$0xf]
    %v268 = vld [vmem:[#allocation6 + $0x34] sm:$0xf]
    %v269 = vld [vmem:[#allocation6 + $0x38] sm:$0xf]
    %v270 = vld [vmem:[#allocation6 + $0x3c] sm:$0xf]
    %v271 = vld [vmem:[#allocation2] sm:$0xff]
    %v272 = vld [vmem:[#allocation3] sm:$0xff]
    %v273 = vpack.c.bf16 %v271, %v271
    %v290 = vunpack.c.l.b16 %v255
    %v291 = vunpack.c.l.b16 %v256
    %v292 = vunpack.c.l.b16 %v257
    %v293 = vunpack.c.l.b16 %v258
    %v294 = vunpack.c.l.b16 %v259
    %v295 = vunpack.c.l.b16 %v260
    %v296 = vunpack.c.l.b16 %v261
    %v297 = vunpack.c.l.b16 %v262
    %v298 = vunpack.c.l.b16 %v263
    %v299 = vunpack.c.l.b16 %v264
    %v300 = vunpack.c.l.b16 %v265
    %v301 = vunpack.c.l.b16 %v266
    %v302 = vunpack.c.l.b16 %v267
    %v303 = vunpack.c.l.b16 %v268
    %v304 = vunpack.c.l.b16 %v269
    %v305 = vunpack.c.l.b16 %v270
    %v306 = vpack.c.b16 %v291, %v290
    %v307 = vpack.c.b16 %v293, %v292
    %v308 = vpack.c.b16 %v295, %v294
    %v309 = vpack.c.b16 %v297, %v296
    %v310 = vpack.c.b16 %v299, %v298
    %v311 = vpack.c.b16 %v301, %v300
    %v312 = vpack.c.b16 %v303, %v302
    %v313 = vpack.c.b16 %v305, %v304
    %322 = vmatpush.bf16.msra.mxu0 %v313
    %323 = vmatpush.bf16.msra.mxu0 %v312
    %324 = vmatpush.bf16.msra.mxu0 %v311
    %325 = vmatpush.bf16.msra.mxu0 %v310
    %326 = vmatpush.bf16.msra.mxu0 %v309
    %327 = vmatpush.bf16.msra.mxu0 %v308
    %328 = vmatpush.bf16.msra.mxu0 %v307
    %329 = vmatpush.bf16.msra.mxu0 %v306
    %330 = vmatmul.bf16.gmra.mxu0 %v273
    %v331 = vpop.f32.mrf.mxu0
    %v332 = vadd.f32 0.0, %v331
    %v333 = vpop.f32.mrf.mxu0
    %334 = vdwg.mxu0
    %v335 = vadd.f32 %v272, %v332
    %v336 = vtanh.pop %v335
    %337 = vst [vmem:[#allocation3] sm:$0xff] %v336
    %s338 = scalar_lea.vmem [#allocation3], 8
    %v339 = vld [vmem:[%s338] sm:$0xff]
    %v340 = vpack.c.bf16 %v336, %v336
    %341 = vmatpush.bf16.msra.mxu0 %v313
    %342 = vmatpush.bf16.msra.mxu0 %v312
    %343 = vmatpush.bf16.msra.mxu0 %v311
    %344 = vmatpush.bf16.msra.mxu0 %v310
    %345 = vmatpush.bf16.msra.mxu0 %v309
    %346 = vmatpush.bf16.msra.mxu0 %v308
    %347 = vmatpush.bf16.msra.mxu0 %v307
    %348 = vmatpush.bf16.msra.mxu0 %v306
    %349 = vmatmul.bf16.gmra.mxu0 %v340
    %v350 = vpop.f32.mrf.mxu0
    %v351 = vadd.f32 0.0, %v350
    %v352 = vpop.f32.mrf.mxu0
    %353 = vdwg.mxu0
    %v354 = vadd.f32 %v339, %v351
    %v355 = vtanh.pop %v354
    %356 = vst [vmem:[%s338] sm:$0xff] %v355
    %s357 = scalar_lea.vmem [#allocation3], 16
    %v358 = vld [vmem:[%s357] sm:$0xff]
    %v359 = vpack.c.bf16 %v355, %v355
    %360 = vmatpush.bf16.msra.mxu0 %v313
    %361 = vmatpush.bf16.msra.mxu0 %v312
    %362 = vmatpush.bf16.msra.mxu0 %v311
    %363 = vmatpush.bf16.msra.mxu0 %v310
    %364 = vmatpush.bf16.msra.mxu0 %v309
    %365 = vmatpush.bf16.msra.mxu0 %v308
    %366 = vmatpush.bf16.msra.mxu0 %v307
    %367 = vmatpush.bf16.msra.mxu0 %v306
    %368 = vmatmul.bf16.gmra.mxu0 %v359
    %v369 = vpop.f32.mrf.mxu0
    %v370 = vadd.f32 0.0, %v369
    %v371 = vpop.f32.mrf.mxu0
    %372 = vdwg.mxu0
    %v373 = vadd.f32 %v358, %v370
    %v374 = vtanh.pop %v373
    %375 = vst [vmem:[%s357] sm:$0xff] %v374
    %s376 = scalar_lea.vmem [#allocation3], 24
    %v377 = vld [vmem:[%s376] sm:$0xff]
    %v378 = vpack.c.bf16 %v374, %v374
    %379 = vmatpush.bf16.msra.mxu0 %v313
    %380 = vmatpush.bf16.msra.mxu0 %v312
    %381 = vmatpush.bf16.msra.mxu0 %v311
    %382 = vmatpush.bf16.msra.mxu0 %v310
    %383 = vmatpush.bf16.msra.mxu0 %v309
    %384 = vmatpush.bf16.msra.mxu0 %v308
    %385 = vmatpush.bf16.msra.mxu0 %v307
    %386 = vmatpush.bf16.msra.mxu0 %v306
    %387 = vmatmul.bf16.gmra.mxu0 %v378
    %v388 = vpop.f32.mrf.mxu0
    %v389 = vadd.f32 0.0, %v388
    %v390 = vpop.f32.mrf.mxu0
    %391 = vdwg.mxu0
    %v392 = vadd.f32 %v377, %v389
    %v393 = vtanh.pop %v392
    %394 = vst [vmem:[%s376] sm:$0xff] %v393
    %s395 = scalar_lea.vmem [#allocation3], 32
    %v396 = vld [vmem:[%s395] sm:$0xff]
    %v397 = vpack.c.bf16 %v393, %v393
    %398 = vmatpush.bf16.msra.mxu0 %v313
    %399 = vmatpush.bf16.msra.mxu0 %v312
    %400 = vmatpush.bf16.msra.mxu0 %v311
    %401 = vmatpush.bf16.msra.mxu0 %v310
    %402 = vmatpush.bf16.msra.mxu0 %v309
    %403 = vmatpush.bf16.msra.mxu0 %v308
    %404 = vmatpush.bf16.msra.mxu0 %v307
    %405 = vmatpush.bf16.msra.mxu0 %v306
    %406 = vmatmul.bf16.gmra.mxu0 %v397
    %v407 = vpop.f32.mrf.mxu0
    %v408 = vadd.f32 0.0, %v407
    %v409 = vpop.f32.mrf.mxu0
    %410 = vdwg.mxu0
    %v411 = vadd.f32 %v396, %v408
    %v412 = vtanh.pop %v411
    %413 = vst [vmem:[%s395] sm:$0xff] %v412
    %s414 = scalar_lea.vmem [#allocation3], 40
    %v415 = vld [vmem:[%s414] sm:$0xff]
    %v416 = vpack.c.bf16 %v412, %v412
    %417 = vmatpush.bf16.msra.mxu0 %v313
    %418 = vmatpush.bf16.msra.mxu0 %v312
    %419 = vmatpush.bf16.msra.mxu0 %v311
    %420 = vmatpush.bf16.msra.mxu0 %v310
    %421 = vmatpush.bf16.msra.mxu0 %v309
    %422 = vmatpush.bf16.msra.mxu0 %v308
    %423 = vmatpush.bf16.msra.mxu0 %v307
    %424 = vmatpush.bf16.msra.mxu0 %v306
    %425 = vmatmul.bf16.gmra.mxu0 %v416
    %v426 = vpop.f32.mrf.mxu0
    %v427 = vadd.f32 0.0, %v426
    %v428 = vpop.f32.mrf.mxu0
    %429 = vdwg.mxu0
    %v430 = vadd.f32 %v415, %v427
    %v431 = vtanh.pop %v430
    %432 = vst [vmem:[%s414] sm:$0xff] %v431
    %s433 = scalar_lea.vmem [#allocation3], 48
    %v434 = vld [vmem:[%s433] sm:$0xff]
    %v435 = vpack.c.bf16 %v431, %v431
    %436 = vmatpush.bf16.msra.mxu0 %v313
    %437 = vmatpush.bf16.msra.mxu0 %v312
    %438 = vmatpush.bf16.msra.mxu0 %v311
    %439 = vmatpush.bf16.msra.mxu0 %v310
    %440 = vmatpush.bf16.msra.mxu0 %v309
    %441 = vmatpush.bf16.msra.mxu0 %v308
    %442 = vmatpush.bf16.msra.mxu0 %v307
    %443 = vmatpush.bf16.msra.mxu0 %v306
    %444 = vmatmul.bf16.gmra.mxu0 %v435
    %v445 = vpop.f32.mrf.mxu0
    %v446 = vadd.f32 0.0, %v445
    %v447 = vpop.f32.mrf.mxu0
    %448 = vdwg.mxu0
    %v449 = vadd.f32 %v434, %v446
    %v450 = vtanh.pop %v449
    %451 = vst [vmem:[%s433] sm:$0xff] %v450
    %s452 = scalar_lea.vmem [#allocation3], 56
    %v453 = vld [vmem:[%s452] sm:$0xff]
    %v454 = vpack.c.bf16 %v450, %v450
    %455 = vmatpush.bf16.msra.mxu0 %v313
    %456 = vmatpush.bf16.msra.mxu0 %v312
    %457 = vmatpush.bf16.msra.mxu0 %v311
    %458 = vmatpush.bf16.msra.mxu0 %v310
    %459 = vmatpush.bf16.msra.mxu0 %v309
    %460 = vmatpush.bf16.msra.mxu0 %v308
    %461 = vmatpush.bf16.msra.mxu0 %v307
    %462 = vmatpush.bf16.msra.mxu0 %v306
    %463 = vmatmul.bf16.gmra.mxu0 %v454
    %v464 = vpop.f32.mrf.mxu0
    %v465 = vadd.f32 0.0, %v464
    %v466 = vpop.f32.mrf.mxu0
    %467 = vdwg.mxu0
    %v468 = vadd.f32 %v453, %v465
    %v469 = vtanh.pop %v468
    %470 = vst [vmem:[%s452] sm:$0xff] %v469
    %471 = vst [vmem:[#allocation2] sm:$0xff] %v469
    %v472 = vld [vmem:[#allocation3] sm:$0xff]
    %v473 = vld [vmem:[#allocation3 + $0x8] sm:$0xff]
    %v474 = vld [vmem:[#allocation3 + $0x10] sm:$0xff]
    %v475 = vld [vmem:[#allocation3 + $0x18] sm:$0xff]
    %v476 = vld [vmem:[#allocation3 + $0x20] sm:$0xff]
    %v477 = vld [vmem:[#allocation3 + $0x28] sm:$0xff]
    %v478 = vld [vmem:[#allocation3 + $0x30] sm:$0xff]
    %v479 = vld [vmem:[#allocation3 + $0x38] sm:$0xff]
    %v480 = vpack.c.bf16 %v473, %v472
    %v481 = vpack.c.bf16 %v475, %v474
    %v482 = vpack.c.bf16 %v477, %v476
    %v483 = vpack.c.bf16 %v479, %v478
    %v484 = vld [vmem:[%s4] sm:$0xf]
    %v485 = vld [vmem:[%s4 + $0x4] sm:$0xf]
    %v486 = vld [vmem:[%s4 + $0x8] sm:$0xf]
    %v487 = vld [vmem:[%s4 + $0xc] sm:$0xf]
    %v488 = vld [vmem:[%s4 + $0x10] sm:$0xf]
    %v489 = vld [vmem:[%s4 + $0x14] sm:$0xf]
    %v490 = vld [vmem:[%s4 + $0x18] sm:$0xf]
    %v491 = vld [vmem:[%s4 + $0x1c] sm:$0xf]
    %v492 = vld [vmem:[%s4 + $0x20] sm:$0xf]
    %v493 = vld [vmem:[%s4 + $0x24] sm:$0xf]
    %v494 = vld [vmem:[%s4 + $0x28] sm:$0xf]
    %v495 = vld [vmem:[%s4 + $0x2c] sm:$0xf]
    %v496 = vld [vmem:[%s4 + $0x30] sm:$0xf]
    %v497 = vld [vmem:[%s4 + $0x34] sm:$0xf]
    %v498 = vld [vmem:[%s4 + $0x38] sm:$0xf]
    %v499 = vld [vmem:[%s4 + $0x3c] sm:$0xf]
    %v500 = vld [vmem:[%s5] sm:$0x1]
    %v502 = vperm.slane %v500, 0
    %v520 = vunpack.c.l.b16 %v484
    %v521 = vunpack.c.l.b16 %v485
    %v522 = vunpack.c.l.b16 %v486
    %v523 = vunpack.c.l.b16 %v487
    %v524 = vunpack.c.l.b16 %v488
    %v525 = vunpack.c.l.b16 %v489
    %v526 = vunpack.c.l.b16 %v490
    %v527 = vunpack.c.l.b16 %v491
    %v528 = vunpack.c.l.b16 %v492
    %v529 = vunpack.c.l.b16 %v493
    %v530 = vunpack.c.l.b16 %v494
    %v531 = vunpack.c.l.b16 %v495
    %v532 = vunpack.c.l.b16 %v496
    %v533 = vunpack.c.l.b16 %v497
    %v534 = vunpack.c.l.b16 %v498
    %v535 = vunpack.c.l.b16 %v499
    %v536 = vpack.c.b16 %v521, %v520
    %v537 = vpack.c.b16 %v523, %v522
    %v538 = vpack.c.b16 %v525, %v524
    %v539 = vpack.c.b16 %v527, %v526
    %v540 = vpack.c.b16 %v529, %v528
    %v541 = vpack.c.b16 %v531, %v530
    %v542 = vpack.c.b16 %v533, %v532
    %v543 = vpack.c.b16 %v535, %v534
    %552 = vmatpush.bf16.msra.mxu0 %v543
    %553 = vmatpush.bf16.msra.mxu0 %v542
    %554 = vmatpush.bf16.msra.mxu0 %v541
    %555 = vmatpush.bf16.msra.mxu0 %v540
    %556 = vmatpush.bf16.msra.mxu0 %v539
    %557 = vmatpush.bf16.msra.mxu0 %v538
    %558 = vmatpush.bf16.msra.mxu0 %v537
    %559 = vmatpush.bf16.msra.mxu0 %v536
    %560 = vmatmul.bf16.gmra.mxu0 %v480
    %v561 = vpop.f32.mrf.mxu0
    %v562 = vadd.f32 %v502, %v561
    %v563 = vpop.f32.mrf.mxu0
    %v564 = vadd.f32 %v502, %v563
    %565 = vmatmul.bf16.gmra.mxu0 %v481
    %v566 = vpop.f32.mrf.mxu0
    %v567 = vadd.f32 %v502, %v566
    %v568 = vpop.f32.mrf.mxu0
    %v569 = vadd.f32 %v502, %v568
    %570 = vmatmul.bf16.gmra.mxu0 %v482
    %v571 = vpop.f32.mrf.mxu0
    %v572 = vadd.f32 %v502, %v571
    %v573 = vpop.f32.mrf.mxu0
    %v574 = vadd.f32 %v502, %v573
    %575 = vmatmul.bf16.gmra.mxu0 %v483
    %v576 = vpop.f32.mrf.mxu0
    %v577 = vadd.f32 %v502, %v576
    %v578 = vpop.f32.mrf.mxu0
    %v579 = vadd.f32 %v502, %v578
    %580 = vdwg.mxu0
    %vm581 = vcmask 64512
    %582 = vst.msk [vmem:[%s6] sm:$0xff] %vm581, %v562
    %583 = vst.msk [vmem:[%s6 + $0x8] sm:$0xff] %vm581, %v564
    %584 = vst.msk [vmem:[%s6 + $0x10] sm:$0xff] %vm581, %v567
    %585 = vst.msk [vmem:[%s6 + $0x18] sm:$0xff] %vm581, %v569
    %586 = vst.msk [vmem:[%s6 + $0x20] sm:$0xff] %vm581, %v572
    %587 = vst.msk [vmem:[%s6 + $0x28] sm:$0xff] %vm581, %v574
    %588 = vst.msk [vmem:[%s6 + $0x30] sm:$0xff] %vm581, %v577
    %589 = vst.msk [vmem:[%s6 + $0x38] sm:$0xff] %vm581, %v579
    // Predicated region
    $region38: #{_logits_and_preds.1} parent=1 // pred_check
      _
    $region39: #{_logits_and_preds.1} parent=1 // pred_check_branch
      %591 = sbr.rel (0) target = $region41
    $region40: #{_logits_and_preds.1} parent=1 // pred_region
      _
    $region41: #{_logits_and_preds.1} parent=1 // pred_fallthru
      _
    // Predicated region
    $region42: #{_logits_and_preds.1} parent=1 // pred_check
      _
    $region43: #{_logits_and_preds.1} parent=1 // pred_check_branch
      %593 = sbr.rel (0) target = $region45
    $region44: #{_logits_and_preds.1} parent=1 // pred_region
      _
    $region45: #{_logits_and_preds.1} parent=1 // pred_fallthru
      _
    %594 = vsyncpa [#allocation5], 1
    %595 = vsyncpa [#allocation7], 1

</llo_original>
